<compile_context>
chip_gen: v5e
topology: v5e:2x2
jax: 0.10.0
libtpu: 0.0.40
codegen_flags: <defaults>
</compile_context>

<pallas_src>
import functools
import math

import jax
import jax.numpy as jnp
from jax.experimental import pallas as pl
from jax.experimental.pallas import tpu as pltpu


def _fusion_attention_kernel(w_ref, xq_ref, xk_ref, o_ref,
                             qt_ref, m_ref, l_ref, acc_ref,
                             *, c, scale, approx_recip):
    """One (batch, q_tile, kv_tile) step of fused projection + flash attention.

    w_ref:  (5C, 2C)  fused QKV weight (PyTorch nn.Linear layout, rows = out feats)
    xq_ref: (2C, tq)  X^T tile for the query tokens of this step
    xk_ref: (2C, tk)  X^T tile for the key/value tokens of this step
    o_ref:  (C,  tq)  output tile == read.T slab (lane-dense)
    qt_ref: (2C, tq)  scratch: scaled Q^T for the current query tile
    m_ref:  (1,  tq)  scratch: running max   (f32)
    l_ref:  (1,  tq)  scratch: running sum   (f32)
    acc_ref:(C,  tq)  scratch: un-normalized O^T accumulator (f32)
    """
    ki = pl.program_id(2)
    cdt = qt_ref.dtype  # compute dtype fed to the MXU

    @pl.when(ki == 0)
    def _init():
        # Project Q once per (batch, q-tile); fold 1/sqrt(Dk) into Q (O(N*2C), not O(N^2)).
        qt = jnp.dot(w_ref[0:2 * c, :], xq_ref[...],
                     preferred_element_type=jnp.float32)            # (2C, tq)
        qt_ref[...] = (qt * scale).astype(cdt)
        m_ref[...] = jnp.full(m_ref.shape, -jnp.inf, dtype=m_ref.dtype)
        l_ref[...] = jnp.zeros(l_ref.shape, dtype=l_ref.dtype)
        acc_ref[...] = jnp.zeros(acc_ref.shape, dtype=acc_ref.dtype)

    # K^T / V^T projections for the current KV tile (shared x tile, fused weight slabs).
    xk = xk_ref[...]
    kt = jnp.dot(w_ref[2 * c:4 * c, :], xk,
                 preferred_element_type=jnp.float32).astype(cdt)     # (2C, tk)
    vt = jnp.dot(w_ref[4 * c:5 * c, :], xk,
                 preferred_element_type=jnp.float32).astype(cdt)     # (C,  tk)

    # Transposed scores: st[i, j] = k_i . q_j  (== S^T), contracting the feature axis
    # directly — no explicit k.T materialization / XLU transpose.
    st = jax.lax.dot_general(kt, qt_ref[...],
                             (((0,), (0,)), ((), ())),
                             preferred_element_type=jnp.float32)     # (tk, tq) f32

    # Online softmax over the KV axis (axis 0); statistics stay in f32.
    m_prev = m_ref[...]                                              # (1, tq)
    m_new = jnp.maximum(m_prev, jnp.max(st, axis=0, keepdims=True))
    alpha = jnp.exp(m_prev - m_new)                                  # (1, tq)
    p = jnp.exp(st - m_new)                                          # (tk, tq) f32
    l_ref[...] = alpha * l_ref[...] + jnp.sum(p, axis=0, keepdims=True)
    acc_ref[...] = alpha * acc_ref[...] + jnp.dot(
        vt, p.astype(cdt), preferred_element_type=jnp.float32)       # (C, tq)
    m_ref[...] = m_new

    @pl.when(ki == pl.num_programs(2) - 1)
    def _finalize():
        # Normalization deferred to the small (C, tq) output tile.
        inv_l = pl.reciprocal(l_ref[...], approx=approx_recip)
        o_ref[...] = (acc_ref[...] * inv_l).astype(o_ref.dtype)


def _pick_tile(n, preferred):
    for t in (preferred, 512, 256, 128):
        if t <= n and n % t == 0:
            return t
    return n  # small / odd N: single full-extent block


def fusion_attention(x1, x2, weight, *, q_tile=256, kv_tile=256,
                     compute_dtype=jnp.bfloat16):
    """x1, x2: [B, C, W, H]; weight: [5C, 2C] (PyTorch nn.Linear layout, bias=False)."""
    B, C, W, H = x1.shape
    N = W * H
    Dk = 2 * C
    scale = 1.0 / math.sqrt(Dk)

    # Channel-major layout [B, 2C, N]: reshape only — no HBM transpose of x, and the
    # PyTorch weight is used as-is (the kernel works on transposed tiles throughout).
    x = jnp.concatenate([x1, x2], axis=1).reshape(B, Dk, N).astype(compute_dtype)
    w = weight.astype(compute_dtype)

    tq = _pick_tile(N, q_tile)
    tk = _pick_tile(N, kv_tile)
    nq = N // tq
    nk = N // tk

    kernel = functools.partial(
        _fusion_attention_kernel, c=C, scale=scale,
        approx_recip=(jnp.dtype(compute_dtype) == jnp.dtype(jnp.bfloat16)))

    out = pl.pallas_call(
        kernel,
        out_shape=jax.ShapeDtypeStruct((B, C, N), x1.dtype),
        grid_spec=pltpu.PrefetchScalarGridSpec(
            num_scalar_prefetch=0,
            grid=(B, nq, nk),
            in_specs=[
                pl.BlockSpec((5 * C, Dk), lambda b, qi, ki: (0, 0)),        # fused QKV weight
                pl.BlockSpec((None, Dk, tq), lambda b, qi, ki: (b, 0, qi)),  # X^T query tile
                pl.BlockSpec((None, Dk, tk), lambda b, qi, ki: (b, 0, ki)),  # X^T kv tile
            ],
            out_specs=pl.BlockSpec((None, C, tq), lambda b, qi, ki: (b, 0, qi)),
            scratch_shapes=[
                pltpu.VMEM((Dk, tq), compute_dtype),   # scaled Q^T
                pltpu.VMEM((1, tq), jnp.float32),      # running max
                pltpu.VMEM((1, tq), jnp.float32),      # running sum
                pltpu.VMEM((C, tq), jnp.float32),      # un-normalized O^T accumulator
            ],
        ),
        compiler_params=pltpu.CompilerParams(
            dimension_semantics=("parallel", "parallel", "arbitrary"),
            vmem_limit_bytes=48 * 1024 * 1024,
        ),
    )(w, x, x)

    # out is already read.T per batch: only a free reshape remains.
    return out.reshape(B, C, W, H)


def fusion_attention_reference(x1, x2, weight):
    """Pure-JAX f32 reference mirroring the PyTorch forward."""
    B, C, W, H = x1.shape
    N = W * H
    x = jnp.concatenate([x1, x2], axis=1).reshape(B, 2 * C, N).transpose(0, 2, 1)
    emb = x @ weight.T
    Q = emb[..., : 2 * C]
    K = emb[..., 2 * C: 4 * C]
    V = emb[..., 4 * C:]
    p = jnp.einsum("bnd,bmd->bnm", Q, K) / math.sqrt(2 * C)
    p = jax.nn.softmax(p, axis=-1)
    read = jnp.einsum("bnm,bmc->bnc", p, V)
    return read.transpose(0, 2, 1).reshape(B, C, W, H)


if __name__ == "__main__":
    B, C, W, H = 2, 4, 16, 16

    key = jax.random.PRNGKey(0)
    k1, k2, kw = jax.random.split(key, 3)
    x1 = jax.random.normal(k1, (B, C, W, H), dtype=jnp.float32)
    x2 = jax.random.normal(k2, (B, C, W, H), dtype=jnp.float32)

    # Stand-in for nn.Linear default init: U(-1/sqrt(fan_in), 1/sqrt(fan_in)), bias=False.
    bound = 1.0 / math.sqrt(2 * C)
    weight = jax.random.uniform(kw, (5 * C, 2 * C), dtype=jnp.float32,
                                minval=-bound, maxval=bound)

    ref = fusion_attention_reference(x1, x2, weight)

    # f32-compute path, multi-tile flash schedule (grid = B x 2 x 2 at N=256).
    out_f32 = jax.block_until_ready(
        fusion_attention(x1, x2, weight, q_tile=128, kv_tile=128,
                         compute_dtype=jnp.float32))
    assert out_f32.shape == (B, C, W, H)
    assert jnp.allclose(out_f32, ref, atol=1e-3, rtol=1e-3), "f32 Pallas output mismatch"

    # Default bf16 MXU path (f32 accumulation + f32 softmax stats).
    out_bf16 = jax.block_until_ready(fusion_attention(x1, x2, weight))
    assert out_bf16.shape == (B, C, W, H)
    assert jnp.allclose(out_bf16, ref, atol=5e-2, rtol=5e-2), "bf16 Pallas output mismatch"

    print("KERNEL_OK")
</pallas_src>

<mosaic_0001>
module attributes {stable_mosaic.version = 11 : i64} {
  func.func @_fusion_attention_kernel(%arg0: i32, %arg1: i32, %arg2: i32, %arg3: memref<20x8xf32, #tpu.memory_space<vmem>>, %arg4: memref<1x8x128xf32, #tpu.memory_space<vmem>>, %arg5: memref<1x8x128xf32, #tpu.memory_space<vmem>>, %arg6: memref<1x4x128xf32, #tpu.memory_space<vmem>>, %arg7: memref<8x128xf32, #tpu.memory_space<vmem>>, %arg8: memref<1x128xf32, #tpu.memory_space<vmem>>, %arg9: memref<1x128xf32, #tpu.memory_space<vmem>>, %arg10: memref<4x128xf32, #tpu.memory_space<vmem>>) attributes {dimension_semantics = [#tpu.dimension_semantics<parallel>, #tpu.dimension_semantics<parallel>, #tpu.dimension_semantics<arbitrary>], iteration_bounds = array<i64: 2, 2, 2>, scalar_prefetch = 0 : i64, scratch_operands = 4 : i64, tpu.core_type = #tpu.core_type<tc>, window_params = [{pipeline_mode = #tpu.pipeline_mode<synchronous>, transform_indices = @transform_0, window_bounds = array<i64: 20, 8>}, {transform_indices = @transform_1, window_bounds = array<i64: 1, 8, 128>}, {transform_indices = @transform_2, window_bounds = array<i64: 1, 8, 128>}, {transform_indices = @transform_3, window_bounds = array<i64: 1, 4, 128>}]} {
    %c0_i32 = arith.constant 0 : i32
    %0 = arith.cmpi eq, %arg2, %c0_i32 : i32
    %1 = arith.extui %0 : i1 to i32
    %c0_i32_0 = arith.constant 0 : i32
    %2 = arith.cmpi ne, %1, %c0_i32_0 : i32
    scf.if %2 {
      %c0_25 = arith.constant 0 : index
      %c0_26 = arith.constant 0 : index
      %36 = vector.load %arg3[%c0_25, %c0_26] : memref<20x8xf32, #tpu.memory_space<vmem>>, vector<8x8xf32>
      %c0_27 = arith.constant 0 : index
      %c0_28 = arith.constant 0 : index
      %c0_29 = arith.constant 0 : index
      %37 = vector.load %arg4[%c0_27, %c0_28, %c0_29] : memref<1x8x128xf32, #tpu.memory_space<vmem>>, vector<1x8x128xf32>
      %38 = vector.shape_cast %37 : vector<1x8x128xf32> to vector<8x128xf32>
      %cst_30 = arith.constant dense<0.000000e+00> : vector<8x128xf32>
      %39 = tpu.matmul %36, %38, %cst_30 {dimension_numbers = #tpu.dot_dimension_numbers<[1], [0], [0], [1], [0, 0, 1, 1], [], []>} : vector<8x8xf32>, vector<8x128xf32>, vector<8x128xf32> -> vector<8x128xf32>
      %cst_31 = arith.constant 0.353553385 : f32
      %40 = vector.broadcast %cst_31 : f32 to vector<8x128xf32>
      %41 = arith.mulf %39, %40 : vector<8x128xf32>
      %c0_32 = arith.constant 0 : index
      %c0_33 = arith.constant 0 : index
      %42 = vector.load %arg7[%c0_32, %c0_33] : memref<8x128xf32, #tpu.memory_space<vmem>>, vector<8x128xf32>
      tpu.vector_store %arg7[%c0_32, %c0_33], %41 {strides = array<i32>} : memref<8x128xf32, #tpu.memory_space<vmem>>, vector<8x128xf32>,
      %cst_34 = arith.constant 0xFF800000 : f32
      %43 = vector.broadcast %cst_34 : f32 to vector<1x128xf32>
      %c0_35 = arith.constant 0 : index
      %c0_36 = arith.constant 0 : index
      %44 = vector.load %arg8[%c0_35, %c0_36] : memref<1x128xf32, #tpu.memory_space<vmem>>, vector<1x128xf32>
      tpu.vector_store %arg8[%c0_35, %c0_36], %43 {strides = array<i32>} : memref<1x128xf32, #tpu.memory_space<vmem>>, vector<1x128xf32>,
      %cst_37 = arith.constant 0.000000e+00 : f32
      %45 = vector.broadcast %cst_37 : f32 to vector<1x128xf32>
      %c0_38 = arith.constant 0 : index
      %c0_39 = arith.constant 0 : index
      %46 = vector.load %arg9[%c0_38, %c0_39] : memref<1x128xf32, #tpu.memory_space<vmem>>, vector<1x128xf32>
      tpu.vector_store %arg9[%c0_38, %c0_39], %45 {strides = array<i32>} : memref<1x128xf32, #tpu.memory_space<vmem>>, vector<1x128xf32>,
      %cst_40 = arith.constant 0.000000e+00 : f32
      %47 = vector.broadcast %cst_40 : f32 to vector<4x128xf32>
      %c0_41 = arith.constant 0 : index
      %c0_42 = arith.constant 0 : index
      %48 = vector.load %arg10[%c0_41, %c0_42] : memref<4x128xf32, #tpu.memory_space<vmem>>, vector<4x128xf32>
      tpu.vector_store %arg10[%c0_41, %c0_42], %47 {strides = array<i32>} : memref<4x128xf32, #tpu.memory_space<vmem>>, vector<4x128xf32>,
    } else {
    }
    %c0 = arith.constant 0 : index
    %c0_1 = arith.constant 0 : index
    %c0_2 = arith.constant 0 : index
    %3 = vector.load %arg5[%c0, %c0_1, %c0_2] : memref<1x8x128xf32, #tpu.memory_space<vmem>>, vector<1x8x128xf32>
    %4 = vector.shape_cast %3 : vector<1x8x128xf32> to vector<8x128xf32>
    %c8 = arith.constant 8 : index
    %c0_3 = arith.constant 0 : index
    %5 = vector.load %arg3[%c8, %c0_3] : memref<20x8xf32, #tpu.memory_space<vmem>>, vector<8x8xf32>
    %cst = arith.constant dense<0.000000e+00> : vector<8x128xf32>
    %6 = tpu.matmul %5, %4, %cst {dimension_numbers = #tpu.dot_dimension_numbers<[1], [0], [0], [1], [0, 0, 1, 1], [], []>} : vector<8x8xf32>, vector<8x128xf32>, vector<8x128xf32> -> vector<8x128xf32>
    %c16 = arith.constant 16 : index
    %c0_4 = arith.constant 0 : index
    %7 = vector.load %arg3[%c16, %c0_4] : memref<20x8xf32, #tpu.memory_space<vmem>>, vector<4x8xf32>
    %cst_5 = arith.constant dense<0.000000e+00> : vector<4x128xf32>
    %8 = tpu.matmul %7, %4, %cst_5 {dimension_numbers = #tpu.dot_dimension_numbers<[1], [0], [0], [1], [0, 0, 1, 1], [], []>} : vector<4x8xf32>, vector<8x128xf32>, vector<4x128xf32> -> vector<4x128xf32>
    %c0_6 = arith.constant 0 : index
    %c0_7 = arith.constant 0 : index
    %9 = vector.load %arg7[%c0_6, %c0_7] : memref<8x128xf32, #tpu.memory_space<vmem>>, vector<8x128xf32>
    %cst_8 = arith.constant dense<0.000000e+00> : vector<128x128xf32>
    %10 = tpu.matmul %6, %9, %cst_8 {dimension_numbers = #tpu.dot_dimension_numbers<[0], [0], [1], [1], [0, 1, 1, 1], [], []>} : vector<8x128xf32>, vector<8x128xf32>, vector<128x128xf32> -> vector<128x128xf32>
    %c0_9 = arith.constant 0 : index
    %c0_10 = arith.constant 0 : index
    %11 = vector.load %arg8[%c0_9, %c0_10] : memref<1x128xf32, #tpu.memory_space<vmem>>, vector<1x128xf32>
    %cst_11 = arith.constant dense<0xFF800000> : vector<128xf32>
    %12 = vector.multi_reduction <maximumf>, %10, %cst_11 [0] : vector<128x128xf32> to vector<128xf32>
    %13 = vector.shape_cast %12 : vector<128xf32> to vector<1x128xf32>
    %14 = arith.maximumf %11, %13 : vector<1x128xf32>
    %15 = arith.subf %11, %14 : vector<1x128xf32>
    %16 = math.exp %15 : vector<1x128xf32>
    %17 = vector.broadcast %14 : vector<1x128xf32> to vector<128x128xf32>
    %18 = arith.subf %10, %17 : vector<128x128xf32>
    %19 = math.exp %18 : vector<128x128xf32>
    %c0_12 = arith.constant 0 : index
    %c0_13 = arith.constant 0 : index
    %20 = vector.load %arg9[%c0_12, %c0_13] : memref<1x128xf32, #tpu.memory_space<vmem>>, vector<1x128xf32>
    %21 = arith.mulf %16, %20 : vector<1x128xf32>
    %cst_14 = arith.constant dense<0.000000e+00> : vector<128xf32>
    %22 = vector.multi_reduction <add>, %19, %cst_14 [0] : vector<128x128xf32> to vector<128xf32>
    %23 = vector.shape_cast %22 : vector<128xf32> to vector<1x128xf32>
    %24 = arith.addf %21, %23 : vector<1x128xf32>
    %c0_15 = arith.constant 0 : index
    %c0_16 = arith.constant 0 : index
    %25 = vector.load %arg9[%c0_15, %c0_16] : memref<1x128xf32, #tpu.memory_space<vmem>>, vector<1x128xf32>
    tpu.vector_store %arg9[%c0_15, %c0_16], %24 {strides = array<i32>} : memref<1x128xf32, #tpu.memory_space<vmem>>, vector<1x128xf32>,
    %c0_17 = arith.constant 0 : index
    %c0_18 = arith.constant 0 : index
    %26 = vector.load %arg10[%c0_17, %c0_18] : memref<4x128xf32, #tpu.memory_space<vmem>>, vector<4x128xf32>
    %27 = vector.broadcast %16 : vector<1x128xf32> to vector<4x128xf32>
    %28 = arith.mulf %27, %26 : vector<4x128xf32>
    %cst_19 = arith.constant dense<0.000000e+00> : vector<4x128xf32>
    %29 = tpu.matmul %8, %19, %cst_19 {dimension_numbers = #tpu.dot_dimension_numbers<[1], [0], [0], [1], [0, 0, 1, 1], [], []>} : vector<4x128xf32>, vector<128x128xf32>, vector<4x128xf32> -> vector<4x128xf32>
    %30 = arith.addf %28, %29 : vector<4x128xf32>
    %c0_20 = arith.constant 0 : index
    %c0_21 = arith.constant 0 : index
    %31 = vector.load %arg10[%c0_20, %c0_21] : memref<4x128xf32, #tpu.memory_space<vmem>>, vector<4x128xf32>
    tpu.vector_store %arg10[%c0_20, %c0_21], %30 {strides = array<i32>} : memref<4x128xf32, #tpu.memory_space<vmem>>, vector<4x128xf32>,
    %c0_22 = arith.constant 0 : index
    %c0_23 = arith.constant 0 : index
    %32 = vector.load %arg8[%c0_22, %c0_23] : memref<1x128xf32, #tpu.memory_space<vmem>>, vector<1x128xf32>
    tpu.vector_store %arg8[%c0_22, %c0_23], %14 {strides = array<i32>} : memref<1x128xf32, #tpu.memory_space<vmem>>, vector<1x128xf32>,
    %c1_i32 = arith.constant 1 : i32
    %33 = arith.cmpi eq, %arg2, %c1_i32 : i32
    %34 = arith.extui %33 : i1 to i32
    %c0_i32_24 = arith.constant 0 : i32
    %35 = arith.cmpi ne, %34, %c0_i32_24 : i32
    scf.if %35 {
      %c0_25 = arith.constant 0 : index
      %c0_26 = arith.constant 0 : index
      %36 = vector.load %arg9[%c0_25, %c0_26] : memref<1x128xf32, #tpu.memory_space<vmem>>, vector<1x128xf32>
      %37 = tpu.reciprocal %36 : vector<1x128xf32> -> vector<1x128xf32>
      %c0_27 = arith.constant 0 : index
      %c0_28 = arith.constant 0 : index
      %38 = vector.load %arg10[%c0_27, %c0_28] : memref<4x128xf32, #tpu.memory_space<vmem>>, vector<4x128xf32>
      %39 = vector.broadcast %37 : vector<1x128xf32> to vector<4x128xf32>
      %40 = arith.mulf %38, %39 : vector<4x128xf32>
      %c0_29 = arith.constant 0 : index
      %c0_30 = arith.constant 0 : index
      %c0_31 = arith.constant 0 : index
      %41 = vector.load %arg6[%c0_29, %c0_30, %c0_31] : memref<1x4x128xf32, #tpu.memory_space<vmem>>, vector<1x4x128xf32>
      %42 = vector.shape_cast %41 : vector<1x4x128xf32> to vector<4x128xf32>
      %43 = vector.shape_cast %40 : vector<4x128xf32> to vector<1x4x128xf32>
      tpu.vector_store %arg6[%c0_29, %c0_30, %c0_31], %43 {strides = array<i32>} : memref<1x4x128xf32, #tpu.memory_space<vmem>>, vector<1x4x128xf32>,
    } else {
    }
    return
  }
  func.func @transform_0(%arg0: i32, %arg1: i32, %arg2: i32) -> (i32, i32) {
    %c0_i32 = arith.constant 0 : i32
    %c0_i32_0 = arith.constant 0 : i32
    %c0_i32_1 = arith.constant 0 : i32
    return %c0_i32, %c0_i32_0 : i32, i32
  }
  func.func @transform_1(%arg0: i32, %arg1: i32, %arg2: i32) -> (i32, i32, i32) {
    %c0_i32 = arith.constant 0 : i32
    %c0_i32_0 = arith.constant 0 : i32
    return %arg0, %c0_i32, %arg1 : i32, i32, i32
  }
  func.func @transform_2(%arg0: i32, %arg1: i32, %arg2: i32) -> (i32, i32, i32) {
    %c0_i32 = arith.constant 0 : i32
    %c0_i32_0 = arith.constant 0 : i32
    return %arg0, %c0_i32, %arg2 : i32, i32, i32
  }
  func.func @transform_3(%arg0: i32, %arg1: i32, %arg2: i32) -> (i32, i32, i32) {
    %c0_i32 = arith.constant 0 : i32
    %c0_i32_0 = arith.constant 0 : i32
    return %arg0, %c0_i32, %arg1 : i32, i32, i32
  }
}

</mosaic_0001>

<llo_original>
// kernel: tpu_custom_call.1
$region0: #{tpu_custom_call.1}
  #allocation0 [shape = 'u32[]', space=smem, size = 0x4, offset = 0x4, fixed_abs, tag = 'smem constant byte address 0x4 - core index']
  #allocation1 [shape = 'u32[72,128]{1,0:T(1,128)}', space=vmem, size = 0x9000, scoped, tag = 'internal scratch']
  #allocation2 [shape = 'f32[8,128]{1,0:T(8,128)}', space=vmem, size = 0x1000, scoped, tag = 'scratch operand']
  #allocation3 [shape = 'f32[1,128]{1,0:T(1,128)}', space=vmem, size = 0x200, scoped, tag = 'scratch operand']
  #allocation4 [shape = 'f32[1,128]{1,0:T(1,128)}', space=vmem, size = 0x200, scoped, tag = 'scratch operand']
  #allocation5 [shape = 'f32[4,128]{1,0:T(4,128)}', space=vmem, size = 0x800, scoped, tag = 'scratch operand']
  %s0 = inlined_call_operand.vmem [shape: f32[20,8], index: 0, kind: input, shape index: {}]
  %s1 = inlined_call_operand.vmem [shape: f32[2,8,256], index: 1, kind: input, shape index: {}]
  %s2 = inlined_call_operand.hbm [shape: f32[2,8,256], index: 2, kind: input, shape index: {}]
  %s3 = inlined_call_operand.hbm [shape: f32[2,4,256], index: 3, kind: output, shape index: {}]
  %s4 = sld [smem:[#allocation0]]
  $region57: #{tpu_custom_call.1} parent=0
    _
  %s6 = ssub.s32 1, %s4
  %s7 = scalar_select 0, %s6, %s4
  $region1: #{tpu_custom_call.1} parent=0
    #allocation6 [shape = 'u8[8192]{0}', space=vmem, size = 0x2000, scoped, tag = 'input window, operand 2']
    #allocation7 [shape = 's32[2]{0}', space=sflag, size = 0x8, scoped, tag = 'scoped memory for tpu_custom_call.1']
    #allocation8 [shape = 's32[2]{0}', space=sflag, size = 0x8, scoped, tag = 'scoped memory for tpu_custom_call.1']
    #allocation9 [shape = 'u8[4096]{0}', space=vmem, size = 0x1000, scoped, tag = 'output window, operand 0']
    %8 = vsyncpa [#allocation7], 0
    %s9 = scalar_lea.sflag [#allocation7], 1
    %10 = vsyncpa %s9, 0
    %11 = vsyncpa [#allocation8], 0
    %s12 = scalar_lea.sflag [#allocation8], 1
    %13 = vsyncpa %s12, 0
    loop: start=0, step=1, limit=10
    $region2: #{tpu_custom_call.1} parent=1 // loop_pre_header
      _
    $region3: #{tpu_custom_call.1} parent=1 // loop_header
      %s15 = sphi 0, %s19
      %p16 = scmp.ge.s32.totalorder %s15, 10
      %s22 = sphi 0, %s41
      %s23 = sphi 0, %s37
      %s24 = sphi 0, %s33
      %s25 = sphi 0, %s22
      %s26 = sphi 0, %s23
      %s27 = sphi 0, %s24
      %s28 = sphi 0, %s25
      %s29 = sphi 0, %s26
      %s30 = sphi 0, %s27
      %s42 = sphi 0, %s42
      %s44 = sphi 0, %s42
      %s45 = sphi 0, %s44
      %s59 = sphi 0, %s45
      %s67 = sphi 0, %s69
      %s70 = sphi 0, %s67
      %s71 = sphi 0, %s70
      %s87 = sphi 0, %s71
      %s95 = sphi 0, %s97
      %s98 = sphi 0, %s95
      %s99 = sphi 0, %s98
      %s115 = sphi 0, %s99
      %s123 = sphi 0, %s125
      %s126 = sphi 0, %s123
      %s127 = sphi 0, %s126
      %s143 = sphi 0, %s127
    $region4: #{tpu_custom_call.1} parent=1 // loop_header_branch
      %18 = sbr.rel (%p16) target = $region8
    $region5: #{tpu_custom_call.1} parent=1 // loop_body
      %s20 = ssub.s32 %s15, 1
      %s21 = ssub.s32 %s15, 2
      %s31 = sadd.s32 1, %s24
      %p32 = scmp.ge.s32.totalorder %s31, 2
      %s33 = scalar_select %p32, 0, %s31
      %s34 = sadd.s32 1, %s23
      %s35 = scalar_select %p32, %s34, %s23
      %p36 = scmp.ge.s32.totalorder %s35, 2
      %s37 = scalar_select %p36, 0, %s35
      %s38 = sadd.s32 1, %s22
      %s39 = scalar_select %p36, %s38, %s22
      %p40 = scmp.ge.s32.totalorder %s39, 2
      %s41 = scalar_select %p40, 0, %s39
      %s43 = sadd.s32 %s42, 1
      %p46 = scmp.eq.s32.totalorder %s15, 7
      %p47 = scmp.ne.s32.totalorder %s42, %s44
      %p48 = scmp.eq.s32.totalorder %s15, 0
      %p49 = por %p47, %p48
      %p50 = scmp.ne.s32.totalorder %s42, %s44
      %p51 = scmp.eq.s32.totalorder %s20, 7
      %p52 = por %p50, %p51
      %p53 = scmp.ne.s32.totalorder %s44, %s45
      %p54 = scmp.eq.s32.totalorder %s20, 0
      %p55 = por %p53, %p54
      %p56 = scmp.ne.s32.totalorder %s44, %s45
      %p57 = scmp.eq.s32.totalorder %s21, 7
      %p58 = por %p56, %p57
      %p60 = scmp.ne.s32.totalorder %s45, %s59
      %p61 = scmp.eq.s32.totalorder %s21, 0
      %p62 = por %p60, %p61
      %s63 = ssub.s32 %s22, %s41
      %s64 = ssub.s32 %s23, %s37
      %s65 = sor.u32 %s63, %s64
      %p66 = scmp.eq.s32.totalorder %s65, 0
      %s68 = sadd.s32 %s67, 1
      %s69 = scalar_select %p66, %s67, %s68
      %p72 = pneg %p66
      %p73 = scmp.eq.s32.totalorder %s15, 7
      %p74 = por %p72, %p73
      %p75 = scmp.ne.s32.totalorder %s67, %s70
      %p76 = scmp.eq.s32.totalorder %s15, 0
      %p77 = por %p75, %p76
      %p78 = scmp.ne.s32.totalorder %s67, %s70
      %p79 = scmp.eq.s32.totalorder %s20, 7
      %p80 = por %p78, %p79
      %p81 = scmp.ne.s32.totalorder %s70, %s71
      %p82 = scmp.eq.s32.totalorder %s20, 0
      %p83 = por %p81, %p82
      %p84 = scmp.ne.s32.totalorder %s70, %s71
      %p85 = scmp.eq.s32.totalorder %s21, 7
      %p86 = por %p84, %p85
      %p88 = scmp.ne.s32.totalorder %s71, %s87
      %p89 = scmp.eq.s32.totalorder %s21, 0
      %p90 = por %p88, %p89
      %s91 = ssub.s32 %s22, %s41
      %s92 = ssub.s32 %s24, %s33
      %s93 = sor.u32 %s91, %s92
      %p94 = scmp.eq.s32.totalorder %s93, 0
      %s96 = sadd.s32 %s95, 1
      %s97 = scalar_select %p94, %s95, %s96
      %p100 = pneg %p94
      %p101 = scmp.eq.s32.totalorder %s15, 7
      %p102 = por %p100, %p101
      %p103 = scmp.ne.s32.totalorder %s95, %s98
      %p104 = scmp.eq.s32.totalorder %s15, 0
      %p105 = por %p103, %p104
      %p106 = scmp.ne.s32.totalorder %s95, %s98
      %p107 = scmp.eq.s32.totalorder %s20, 7
      %p108 = por %p106, %p107
      %p109 = scmp.ne.s32.totalorder %s98, %s99
      %p110 = scmp.eq.s32.totalorder %s20, 0
      %p111 = por %p109, %p110
      %p112 = scmp.ne.s32.totalorder %s98, %s99
      %p113 = scmp.eq.s32.totalorder %s21, 7
      %p114 = por %p112, %p113
      %p116 = scmp.ne.s32.totalorder %s99, %s115
      %p117 = scmp.eq.s32.totalorder %s21, 0
      %p118 = por %p116, %p117
      %s119 = ssub.s32 %s22, %s41
      %s120 = ssub.s32 %s23, %s37
      %s121 = sor.u32 %s119, %s120
      %p122 = scmp.eq.s32.totalorder %s121, 0
      %s124 = sadd.s32 %s123, 1
      %s125 = scalar_select %p122, %s123, %s124
      %p128 = pneg %p122
      %p129 = scmp.eq.s32.totalorder %s15, 7
      %p130 = por %p128, %p129
      %p131 = scmp.ne.s32.totalorder %s123, %s126
      %p132 = scmp.eq.s32.totalorder %s15, 0
      %p133 = por %p131, %p132
      %p134 = scmp.ne.s32.totalorder %s123, %s126
      %p135 = scmp.eq.s32.totalorder %s20, 7
      %p136 = por %p134, %p135
      %p137 = scmp.ne.s32.totalorder %s126, %s127
      %p138 = scmp.eq.s32.totalorder %s20, 0
      %p139 = por %p137, %p138
      %p140 = scmp.ne.s32.totalorder %s126, %s127
      %p141 = scmp.eq.s32.totalorder %s21, 7
      %p142 = por %p140, %p141
      %p144 = scmp.ne.s32.totalorder %s127, %s143
      %p145 = scmp.eq.s32.totalorder %s21, 0
      %p146 = por %p144, %p145
      %p147 = scmp.le.s32.totalorder 1, %s15
      %p148 = scmp.lt.s32.totalorder %s15, 9
      %p149 = pnand %p147, %p148
      %p150 = pneg %p149
      // Predicated region
      $region9: #{tpu_custom_call.1} parent=5 // pred_check
        _
      $region10: #{tpu_custom_call.1} parent=5 // pred_check_branch
        %152 = sbr.rel (%p149) target = $region12
      $region11: #{tpu_custom_call.1} parent=5 // pred_region
        %s153 = ssub.s32 %s15, 1
        // Predicated region
        $region13: #{tpu_custom_call.1} parent=11 // pred_check
          %p154 = pneg %p55
        $region14: #{tpu_custom_call.1} parent=11 // pred_check_branch
          %156 = sbr.rel (%p154) target = $region16
        $region15: #{tpu_custom_call.1} parent=11 // pred_region
          _
        $region16: #{tpu_custom_call.1} parent=11 // pred_fallthru
          _
      $region12: #{tpu_custom_call.1} parent=5 // pred_fallthru
        _
      %p157 = scmp.lt.s32.totalorder %s15, 8
      // Predicated region
      $region17: #{tpu_custom_call.1} parent=5 // pred_check
        %p158 = pneg %p157
      $region18: #{tpu_custom_call.1} parent=5 // pred_check_branch
        %160 = sbr.rel (%p158) target = $region20
      $region19: #{tpu_custom_call.1} parent=5 // pred_region
        // Predicated region
        $region21: #{tpu_custom_call.1} parent=19 // pred_check
          %p161 = pneg %p77
        $region22: #{tpu_custom_call.1} parent=19 // pred_check_branch
          %163 = sbr.rel (%p161) target = $region24
        $region23: #{tpu_custom_call.1} parent=19 // pred_region
          %p164 = scmp.lt.s32.totalorder %s22, 1
          %s165 = scalar_select %p164, %s22, 1
          %p166 = scmp.lt.s32.totalorder %s23, 1
          %s167 = scalar_select %p166, %s23, 1
          %s168 = smul.addr %s165, 2
          %s169 = sadd.s32 %s167, %s168
          %s170 = smul.addr %s169, 8
          %s171 = scalar_lea.vmem %s1, %s170
        $region24: #{tpu_custom_call.1} parent=19 // pred_fallthru
          _
        // Predicated region
        $region25: #{tpu_custom_call.1} parent=19 // pred_check
          %p172 = pneg %p105
        $region26: #{tpu_custom_call.1} parent=19 // pred_check_branch
          %174 = sbr.rel (%p172) target = $region28
        $region27: #{tpu_custom_call.1} parent=19 // pred_region
          %s175 = sand.u32 %s95, 1
          %s176 = scalar_lea.sflag [#allocation7], %s175
          %s177 = sand.u32 %s95, 1
          %s178 = smul.addr %s177, 8
          %s179 = scalar_lea.vmem [#allocation6], %s178
          %181 = vsyncadd %s176, 0
          %s182 = smul.addr %s22, 2
          %s183 = sadd.s32 %s24, %s182
          %s184 = smul.addr %s183, 8
          %s185 = scalar_lea.hbm %s2, %s184
          %s187 = sshll.u32 %s185, 4
          %s188 = int_to_ptr.hbm [resolvable:$true] %s187
          %s189 = sshll.u32 %s179, 4
          %s190 = int_to_ptr.vmem [resolvable:$true] %s189
          %192 = dma.hbm_to_vmem [thread:$0]  %s188, 128, %s190, %s176
        $region28: #{tpu_custom_call.1} parent=19 // pred_fallthru
          _
      $region20: #{tpu_custom_call.1} parent=5 // pred_fallthru
        _
      %p193 = scmp.le.s32.totalorder 1, %s15
      %p194 = scmp.lt.s32.totalorder %s15, 9
      %p195 = pnand %p193, %p194
      %p196 = pneg %p195
      // Predicated region
      $region29: #{tpu_custom_call.1} parent=5 // pred_check
        _
      $region30: #{tpu_custom_call.1} parent=5 // pred_check_branch
        %198 = sbr.rel (%p195) target = $region32
      $region31: #{tpu_custom_call.1} parent=5 // pred_region
        %s199 = ssub.s32 %s15, 1
        %s200 = sand.u32 %s98, 1
        %s201 = scalar_lea.sflag [#allocation7], %s200
        %s202 = sand.u32 %s98, 1
        %s203 = smul.addr %s202, 8
        %s204 = scalar_lea.vmem [#allocation6], %s203
        // Predicated region
        $region33: #{tpu_custom_call.1} parent=31 // pred_check
          %p205 = pneg %p111
        $region34: #{tpu_custom_call.1} parent=31 // pred_check_branch
          %207 = sbr.rel (%p205) target = $region36
        $region35: #{tpu_custom_call.1} parent=31 // pred_region
          %209 = dma.done %s201, 128
        $region36: #{tpu_custom_call.1} parent=31 // pred_fallthru
          _
        %p210 = pneg %p55
        %p211 = pneg %p52
        %p212 = scmp.lt.s32.totalorder %s25, 1
        %s213 = scalar_select %p212, %s25, 1
        %p214 = scmp.lt.s32.totalorder %s26, 1
        %s215 = scalar_select %p214, %s26, 1
        %s216 = smul.addr %s213, 2
        %s217 = sadd.s32 %s215, %s216
        %s218 = smul.addr %s217, 8
        %s219 = scalar_lea.vmem %s1, %s218
        %p220 = pneg %p83
        %p221 = pneg %p80
        %s222 = sand.u32 %s98, 1
        %s223 = scalar_lea.sflag [#allocation7], %s222
        %s224 = sand.u32 %s98, 1
        %s225 = smul.addr %s224, 8
        %s226 = scalar_lea.vmem [#allocation6], %s225
        %p227 = pneg %p111
        %p228 = pneg %p108
        %p229 = pneg %p139
        %p230 = pneg %p136
        %s231 = sand.u32 %s126, 1
        %s232 = scalar_lea.sflag [#allocation8], %s231
        %s233 = sand.u32 %s126, 1
        %s234 = smul.addr %s233, 4
        %s235 = scalar_lea.vmem [#allocation9], %s234
        %p236 = scmp.lt.s32.totalorder %s25, 1
        %s237 = scalar_select %p236, %s25, 1
        %p238 = scmp.lt.s32.totalorder %s26, 1
        %s239 = scalar_select %p238, %s26, 1
        %s240 = smul.addr %s237, 2
        %s241 = sadd.s32 %s239, %s240
        %s242 = smul.addr %s241, 8
        %s243 = scalar_lea.vmem %s1, %s242
        %p244 = scmp.eq.s32.totalorder %s27, 0
        // Predicated region
        $region37: #{tpu_custom_call.1} parent=31 // pred_check
          %p245 = pneg %p244
        $region38: #{tpu_custom_call.1} parent=31 // pred_check_branch
          %247 = sbr.rel (%p245) target = $region40
        $region39: #{tpu_custom_call.1} parent=31 // pred_region
          %v248 = vld [vmem:[%s0] sm:$0xff]
          %v249 = vld [vmem:[%s243] sm:$0xff]
          %vm250 = vcmask 64512
          %v252 = vsel %vm250, %v248, 0
          %254 = vmatpush.msra.mxu0 0.0
          %255 = vmatpush.msra.mxu0 0.0
          %256 = vmatpush.msra.mxu0 0.0
          %257 = vmatpush.msra.mxu0 0.0
          %258 = vmatpush.msra.mxu0 0.0
          %259 = vmatpush.msra.mxu0 0.0
          %260 = vmatpush.msra.mxu0 0.0
          %261 = vmatpush.msra.mxu0 0.0
          %262 = vmatpush.msra.mxu0 0.0
          %263 = vmatpush.msra.mxu0 0.0
          %264 = vmatpush.msra.mxu0 0.0
          %265 = vmatpush.msra.mxu0 0.0
          %266 = vmatpush.msra.mxu0 0.0
          %267 = vmatpush.msra.mxu0 0.0
          %268 = vmatpush.msra.mxu0 0.0
          %269 = vmatpush.msra.mxu0 %v249
          %270 = vmatmul.f32.gmra.mxu0 %v252
          %v271 = vpop.f32.mrf.mxu0
          %v272 = vadd.f32 0.0, %v271
          %273 = vdwg.mxu0
          %v274 = vmul.f32 %v272, 0.35355338
          %275 = vst [vmem:[#allocation2] sm:$0xff] %v274
          %276 = vst [vmem:[#allocation3] sm:$0x1] -inf
          %277 = vst [vmem:[#allocation4] sm:$0x1] 0.0
          %278 = vst [vmem:[#allocation5] sm:$0xf] 0.0
        $region40: #{tpu_custom_call.1} parent=31 // pred_fallthru
          _
        %v279 = vld [vmem:[%s204] sm:$0xff]
        %v280 = vld [vmem:[%s0 + $0x8] sm:$0xff]
        %vm281 = vcmask 64512
        %v283 = vsel %vm281, %v280, 0
        %285 = vmatpush.msra.mxu0 0.0
        %286 = vmatpush.msra.mxu0 0.0
        %287 = vmatpush.msra.mxu0 0.0
        %288 = vmatpush.msra.mxu0 0.0
        %289 = vmatpush.msra.mxu0 0.0
        %290 = vmatpush.msra.mxu0 0.0
        %291 = vmatpush.msra.mxu0 0.0
        %292 = vmatpush.msra.mxu0 0.0
        %293 = vmatpush.msra.mxu0 0.0
        %294 = vmatpush.msra.mxu0 0.0
        %295 = vmatpush.msra.mxu0 0.0
        %296 = vmatpush.msra.mxu0 0.0
        %297 = vmatpush.msra.mxu0 0.0
        %298 = vmatpush.msra.mxu0 0.0
        %299 = vmatpush.msra.mxu0 0.0
        %300 = vmatpush.msra.mxu0 %v279
        %301 = vmatmul.f32.gmra.mxu0 %v283
        %v302 = vpop.f32.mrf.mxu0
        %v303 = vadd.f32 0.0, %v302
        %304 = vdwg.mxu0
        %v305 = vld [vmem:[%s0 + $0x10] sm:$0xf]
        %v307 = vsel %vm281, %v305, 0
        %309 = vmatpush.msra.mxu0 0.0
        %310 = vmatpush.msra.mxu0 0.0
        %311 = vmatpush.msra.mxu0 0.0
        %312 = vmatpush.msra.mxu0 0.0
        %313 = vmatpush.msra.mxu0 0.0
        %314 = vmatpush.msra.mxu0 0.0
        %315 = vmatpush.msra.mxu0 0.0
        %316 = vmatpush.msra.mxu0 0.0
        %317 = vmatpush.msra.mxu0 0.0
        %318 = vmatpush.msra.mxu0 0.0
        %319 = vmatpush.msra.mxu0 0.0
        %320 = vmatpush.msra.mxu0 0.0
        %321 = vmatpush.msra.mxu0 0.0
        %322 = vmatpush.msra.mxu0 0.0
        %323 = vmatpush.msra.mxu0 0.0
        %324 = vmatpush.msra.mxu0 %v279
        %325 = vmatmul.f32.gmra.mxu0 %v307
        %v326 = vpop.f32.mrf.mxu0
        %v327 = vadd.f32 0.0, %v326
        %328 = vdwg.mxu0
        %v329 = vld [vmem:[#allocation2] sm:$0xff]
        %330 = vxpose.xlu0.b32.start [1/16] %v303, 128
        %331 = vxpose.xlu0.b32.cont [2/16] 0.0, 128
        %332 = vxpose.xlu0.b32.cont [3/16] 0.0, 128
        %333 = vxpose.xlu0.b32.cont [4/16] 0.0, 128
        %334 = vxpose.xlu0.b32.cont [5/16] 0.0, 128
        %335 = vxpose.xlu0.b32.cont [6/16] 0.0, 128
        %336 = vxpose.xlu0.b32.cont [7/16] 0.0, 128
        %337 = vxpose.xlu0.b32.cont [8/16] 0.0, 128
        %338 = vxpose.xlu0.b32.cont [9/16] 0.0, 128
        %339 = vxpose.xlu0.b32.cont [10/16] 0.0, 128
        %340 = vxpose.xlu0.b32.cont [11/16] 0.0, 128
        %341 = vxpose.xlu0.b32.cont [12/16] 0.0, 128
        %342 = vxpose.xlu0.b32.cont [13/16] 0.0, 128
        %343 = vxpose.xlu0.b32.cont [14/16] 0.0, 128
        %344 = vxpose.xlu0.b32.cont [15/16] 0.0, 128
        %345 = vxpose.xlu0.b32.end [16/16] 0.0, 128
        %v346 = vpop.trf.xlu0
        %v347 = vpop.trf.xlu0
        %v348 = vpop.trf.xlu0
        %v349 = vpop.trf.xlu0
        %v350 = vpop.trf.xlu0
        %v351 = vpop.trf.xlu0
        %v352 = vpop.trf.xlu0
        %v353 = vpop.trf.xlu0
        %v354 = vpop.trf.xlu0
        %v355 = vpop.trf.xlu0
        %v356 = vpop.trf.xlu0
        %v357 = vpop.trf.xlu0
        %v358 = vpop.trf.xlu0
        %v359 = vpop.trf.xlu0
        %v360 = vpop.trf.xlu0
        %v361 = vpop.trf.xlu0
        %v363 = vsel %vm281, %v346, 0
        %v366 = vsel %vm281, %v347, 0
        %v369 = vsel %vm281, %v348, 0
        %v372 = vsel %vm281, %v349, 0
        %v375 = vsel %vm281, %v350, 0
        %v378 = vsel %vm281, %v351, 0
        %v381 = vsel %vm281, %v352, 0
        %v384 = vsel %vm281, %v353, 0
        %v387 = vsel %vm281, %v354, 0
        %v390 = vsel %vm281, %v355, 0
        %v393 = vsel %vm281, %v356, 0
        %v396 = vsel %vm281, %v357, 0
        %v399 = vsel %vm281, %v358, 0
        %v402 = vsel %vm281, %v359, 0
        %v405 = vsel %vm281, %v360, 0
        %v408 = vsel %vm281, %v361, 0
        %410 = vmatpush.msra.mxu0 0.0
        %411 = vmatpush.msra.mxu0 0.0
        %412 = vmatpush.msra.mxu0 0.0
        %413 = vmatpush.msra.mxu0 0.0
        %414 = vmatpush.msra.mxu0 0.0
        %415 = vmatpush.msra.mxu0 0.0
        %416 = vmatpush.msra.mxu0 0.0
        %417 = vmatpush.msra.mxu0 0.0
        %418 = vmatpush.msra.mxu0 0.0
        %419 = vmatpush.msra.mxu0 0.0
        %420 = vmatpush.msra.mxu0 0.0
        %421 = vmatpush.msra.mxu0 0.0
        %422 = vmatpush.msra.mxu0 0.0
        %423 = vmatpush.msra.mxu0 0.0
        %424 = vmatpush.msra.mxu0 0.0
        %425 = vmatpush.msra.mxu0 %v329
        %426 = vmatmul.f32.gmra.mxu0 %v363
        %v427 = vpop.f32.mrf.mxu0
        %v428 = vadd.f32 0.0, %v427
        %429 = vmatmul.f32.gmra.mxu0 %v366
        %v430 = vpop.f32.mrf.mxu0
        %v431 = vadd.f32 0.0, %v430
        %432 = vmatmul.f32.gmra.mxu0 %v369
        %v433 = vpop.f32.mrf.mxu0
        %v434 = vadd.f32 0.0, %v433
        %435 = vmatmul.f32.gmra.mxu0 %v372
        %v436 = vpop.f32.mrf.mxu0
        %v437 = vadd.f32 0.0, %v436
        %438 = vmatmul.f32.gmra.mxu0 %v375
        %v439 = vpop.f32.mrf.mxu0
        %v440 = vadd.f32 0.0, %v439
        %441 = vmatmul.f32.gmra.mxu0 %v378
        %v442 = vpop.f32.mrf.mxu0
        %v443 = vadd.f32 0.0, %v442
        %444 = vmatmul.f32.gmra.mxu0 %v381
        %v445 = vpop.f32.mrf.mxu0
        %v446 = vadd.f32 0.0, %v445
        %447 = vmatmul.f32.gmra.mxu0 %v384
        %v448 = vpop.f32.mrf.mxu0
        %v449 = vadd.f32 0.0, %v448
        %450 = vmatmul.f32.gmra.mxu0 %v387
        %v451 = vpop.f32.mrf.mxu0
        %v452 = vadd.f32 0.0, %v451
        %453 = vmatmul.f32.gmra.mxu0 %v390
        %v454 = vpop.f32.mrf.mxu0
        %v455 = vadd.f32 0.0, %v454
        %456 = vmatmul.f32.gmra.mxu0 %v393
        %v457 = vpop.f32.mrf.mxu0
        %v458 = vadd.f32 0.0, %v457
        %459 = vmatmul.f32.gmra.mxu0 %v396
        %v460 = vpop.f32.mrf.mxu0
        %v461 = vadd.f32 0.0, %v460
        %462 = vmatmul.f32.gmra.mxu0 %v399
        %v463 = vpop.f32.mrf.mxu0
        %v464 = vadd.f32 0.0, %v463
        %465 = vmatmul.f32.gmra.mxu0 %v402
        %v466 = vpop.f32.mrf.mxu0
        %v467 = vadd.f32 0.0, %v466
        %468 = vmatmul.f32.gmra.mxu0 %v405
        %v469 = vpop.f32.mrf.mxu0
        %v470 = vadd.f32 0.0, %v469
        %471 = vmatmul.f32.gmra.mxu0 %v408
        %v472 = vpop.f32.mrf.mxu0
        %v473 = vadd.f32 0.0, %v472
        %474 = vdwg.mxu0
        %v475 = vld [vmem:[#allocation3] sm:$0x1]
        %v476 = vmax.f32 %v428, %v440
        %v477 = vmax.f32 %v431, %v443
        %v478 = vmax.f32 %v434, %v446
        %v479 = vmax.f32 %v437, %v449
        %v480 = vmax.f32 %v476, %v452
        %v481 = vmax.f32 %v477, %v455
        %v482 = vmax.f32 %v478, %v458
        %v483 = vmax.f32 %v479, %v461
        %v484 = vmax.f32 %v480, %v464
        %v485 = vmax.f32 %v481, %v467
        %v486 = vmax.f32 %v482, %v470
        %v487 = vmax.f32 %v483, %v473
        %v488 = vmax.f32 %v484, %v485
        %v489 = vmax.f32 %v486, %v487
        %v490 = vmax.f32 %v488, %v489
        %v491 = vrot.slane %v490, 4
        %v492 = vmax.f32 %v490, %v491
        %v493 = vrot.slane %v492, 2
        %v494 = vmax.f32 %v492, %v493
        %v495 = vrot.slane %v494, 1
        %v496 = vmax.f32 %v494, %v495
        %v497 = vmax.f32 %v475, %v496
        %v498 = vsub.f32 %v475, %v497
        %v499 = vmul.f32 %v498, 1.442695
        %v500 = vpow.pop %v499
        %v502 = vperm.slane %v497, 0
        %v504 = vsub.f32 %v428, %v502
        %v505 = vsub.f32 %v431, %v502
        %v506 = vsub.f32 %v434, %v502
        %v507 = vsub.f32 %v437, %v502
        %v508 = vsub.f32 %v440, %v502
        %v509 = vsub.f32 %v443, %v502
        %v510 = vsub.f32 %v446, %v502
        %v511 = vsub.f32 %v449, %v502
        %v512 = vsub.f32 %v452, %v502
        %v513 = vsub.f32 %v455, %v502
        %v514 = vsub.f32 %v458, %v502
        %v515 = vsub.f32 %v461, %v502
        %v516 = vsub.f32 %v464, %v502
        %v517 = vsub.f32 %v467, %v502
        %v518 = vsub.f32 %v470, %v502
        %v519 = vsub.f32 %v473, %v502
        %v520 = vmul.f32 %v504, 1.442695
        %v521 = vpow.pop %v520
        %v522 = vmul.f32 %v505, 1.442695
        %v523 = vpow.pop %v522
        %v524 = vmul.f32 %v506, 1.442695
        %v525 = vpow.pop %v524
        %v526 = vmul.f32 %v507, 1.442695
        %v527 = vpow.pop %v526
        %v528 = vmul.f32 %v508, 1.442695
        %v529 = vpow.pop %v528
        %v530 = vmul.f32 %v509, 1.442695
        %v531 = vpow.pop %v530
        %v532 = vmul.f32 %v510, 1.442695
        %v533 = vpow.pop %v532
        %v534 = vmul.f32 %v511, 1.442695
        %v535 = vpow.pop %v534
        %v536 = vmul.f32 %v512, 1.442695
        %v537 = vpow.pop %v536
        %v538 = vmul.f32 %v513, 1.442695
        %v539 = vpow.pop %v538
        %v540 = vmul.f32 %v514, 1.442695
        %v541 = vpow.pop %v540
        %v542 = vmul.f32 %v515, 1.442695
        %v543 = vpow.pop %v542
        %v544 = vmul.f32 %v516, 1.442695
        %v545 = vpow.pop %v544
        %v546 = vmul.f32 %v517, 1.442695
        %v547 = vpow.pop %v546
        %v548 = vmul.f32 %v518, 1.442695
        %v549 = vpow.pop %v548
        %v550 = vmul.f32 %v519, 1.442695
        %v551 = vpow.pop %v550
        %v552 = vld [vmem:[#allocation4] sm:$0x1]
        %v553 = vmul.f32 %v500, %v552
        %v554 = vadd.f32 %v521, %v523
        %v555 = vadd.f32 %v554, %v525
        %v556 = vadd.f32 %v555, %v527
        %v557 = vadd.f32 %v556, %v529
        %v558 = vadd.f32 %v557, %v531
        %v559 = vadd.f32 %v558, %v533
        %v560 = vadd.f32 %v559, %v535
        %v561 = vadd.f32 %v560, %v537
        %v562 = vadd.f32 %v561, %v539
        %v563 = vadd.f32 %v562, %v541
        %v564 = vadd.f32 %v563, %v543
        %v565 = vadd.f32 %v564, %v545
        %v566 = vadd.f32 %v565, %v547
        %v567 = vadd.f32 %v566, %v549
        %v568 = vadd.f32 %v567, %v551
        %v569 = vrot.slane %v568, 4
        %v570 = vadd.f32 %v568, %v569
        %v571 = vrot.slane %v570, 2
        %v572 = vadd.f32 %v570, %v571
        %v573 = vrot.slane %v572, 1
        %v574 = vadd.f32 %v572, %v573
        %v575 = vadd.f32 %v553, %v574
        %576 = vst [vmem:[#allocation4] sm:$0x1] %v575
        %v577 = vld [vmem:[#allocation5] sm:$0xf]
        %v579 = vperm.slane %v500, 0
        %v581 = vmul.f32 %v579, %v577
        %582 = vmatpush.msra.mxu0 %v551
        %583 = vmatpush.msra.mxu0 %v549
        %584 = vmatpush.msra.mxu0 %v547
        %585 = vmatpush.msra.mxu0 %v545
        %586 = vmatpush.msra.mxu0 %v543
        %587 = vmatpush.msra.mxu0 %v541
        %588 = vmatpush.msra.mxu0 %v539
        %589 = vmatpush.msra.mxu0 %v537
        %590 = vmatpush.msra.mxu0 %v535
        %591 = vmatpush.msra.mxu0 %v533
        %592 = vmatpush.msra.mxu0 %v531
        %593 = vmatpush.msra.mxu0 %v529
        %594 = vmatpush.msra.mxu0 %v527
        %595 = vmatpush.msra.mxu0 %v525
        %596 = vmatpush.msra.mxu0 %v523
        %597 = vmatpush.msra.mxu0 %v521
        %598 = vmatmul.f32.gmra.mxu0 %v327
        %v599 = vpop.f32.mrf.mxu0
        %v600 = vadd.f32 0.0, %v599
        %601 = vdwg.mxu0
        %v602 = vadd.f32 %v581, %v600
        %603 = vst [vmem:[#allocation5] sm:$0xf] %v602
        %604 = vst [vmem:[#allocation3] sm:$0x1] %v497
        %p605 = scmp.eq.s32.totalorder %s27, 1
        // Predicated region
        $region41: #{tpu_custom_call.1} parent=31 // pred_check
          %p606 = pneg %p605
        $region42: #{tpu_custom_call.1} parent=31 // pred_check_branch
          %608 = sbr.rel (%p606) target = $region44
        $region43: #{tpu_custom_call.1} parent=31 // pred_region
          %v609 = vld [vmem:[#allocation4] sm:$0x1]
          %v610 = vrcp.pop %v609
          %v611 = vmul.f32 %v609, %v610
          %v612 = vsub.f32 1.0, %v611
          %v613 = vmul.f32 %v610, %v612
          %v614 = vadd.f32 %v610, %v613
          %vm615 = vweird.f32 %v609
          %vm616 = vweird.f32 %v610
          %vm617 = vmor %vm615, %vm616
          %v618 = vsel %vm617, %v610, %v614
          %v619 = vand.u32 2147483647, %v609
          %vm620 = vcmp.eq.f32.partialorder %v619, 8.507059e+37
          %v621 = vand.u32 %v609, 2147483648
          %v622 = vor.u32 1.1754944e-38, %v621
          %v623 = vsel %vm620, %v622, %v618
          %v624 = vld [vmem:[#allocation5] sm:$0xf]
          %v626 = vperm.slane %v623, 0
          %v628 = vmul.f32 %v624, %v626
          %629 = vst [vmem:[%s235] sm:$0xf] %v628
        $region44: #{tpu_custom_call.1} parent=31 // pred_fallthru
          _
        %s630 = sand.u32 %s126, 1
        %s631 = scalar_lea.sflag [#allocation8], %s630
        %s632 = sand.u32 %s126, 1
        %s633 = smul.addr %s632, 4
        %s634 = scalar_lea.vmem [#allocation9], %s633
        // Predicated region
        $region45: #{tpu_custom_call.1} parent=31 // pred_check
          %p635 = pneg %p136
        $region46: #{tpu_custom_call.1} parent=31 // pred_check_branch
          %637 = sbr.rel (%p635) target = $region48
        $region47: #{tpu_custom_call.1} parent=31 // pred_region
          %639 = vsyncadd %s631, 0
          %s640 = smul.addr %s25, 2
          %s641 = sadd.s32 %s26, %s640
          %s642 = smul.addr %s641, 4
          %s643 = scalar_lea.hbm %s3, %s642
          %s645 = sshll.u32 %s634, 4
          %s646 = int_to_ptr.vmem [resolvable:$true] %s645
          %s647 = sshll.u32 %s643, 4
          %s648 = int_to_ptr.hbm [resolvable:$true] %s647
          %650 = dma.vmem_to_hbm [thread:$0]  %s646, 64, %s648, %s631
        $region48: #{tpu_custom_call.1} parent=31 // pred_fallthru
          _
      $region32: #{tpu_custom_call.1} parent=5 // pred_fallthru
        _
      %p651 = scmp.le.s32.totalorder 2, %s15
      // Predicated region
      $region49: #{tpu_custom_call.1} parent=5 // pred_check
        %p652 = pneg %p651
      $region50: #{tpu_custom_call.1} parent=5 // pred_check_branch
        %654 = sbr.rel (%p652) target = $region52
      $region51: #{tpu_custom_call.1} parent=5 // pred_region
        %s655 = ssub.s32 %s15, 2
        // Predicated region
        $region53: #{tpu_custom_call.1} parent=51 // pred_check
          %p656 = pneg %p142
        $region54: #{tpu_custom_call.1} parent=51 // pred_check_branch
          %658 = sbr.rel (%p656) target = $region56
        $region55: #{tpu_custom_call.1} parent=51 // pred_region
          %s659 = sand.u32 %s127, 1
          %s660 = scalar_lea.sflag [#allocation8], %s659
          %s661 = sand.u32 %s127, 1
          %s662 = smul.addr %s661, 4
          %s663 = scalar_lea.vmem [#allocation9], %s662
          %665 = dma.done %s660, 64
        $region56: #{tpu_custom_call.1} parent=51 // pred_fallthru
          _
      $region52: #{tpu_custom_call.1} parent=5 // pred_fallthru
        _
    $region6: #{tpu_custom_call.1} parent=1 // loop_footer
      %s19 = sadd.s32 1, %s15
    $region7: #{tpu_custom_call.1} parent=1 // loop_footer_branch
      %14 = sbr.rel target = $region3
    $region8: #{tpu_custom_call.1} parent=1 // loop_exit
      _
    %666 = vsyncpa [#allocation7], 1
    %s667 = scalar_lea.sflag [#allocation7], 1
    %668 = vsyncpa %s667, 1
    %669 = vsyncpa [#allocation8], 1
    %s670 = scalar_lea.sflag [#allocation8], 1
    %671 = vsyncpa %s670, 1

</llo_original>
